<compile_context>
chip_gen: v5e
topology: v5e:2x2
jax: 0.10.0
libtpu: 0.0.40
codegen_flags: <defaults>
</compile_context>

<pallas_src>
import functools

import jax
import jax.numpy as jnp
from jax import lax
from jax.experimental import pallas as pl
from jax.experimental.pallas import tpu as pltpu

LANES = 128
SUBLANES = 8
CHUNK_ROWS = 512          # in-kernel accumulation chunk: 64 f32 vregs / operand
NSPLIT = 2                # leading "parallel" grid axis (v7x: 2 TensorCores)
EPS = 1e-07


# ----------------------------------------------------------------------------
# small static helpers
# ----------------------------------------------------------------------------
def _is_nonneg_int(g):
    try:
        return float(g) == int(g) and int(g) >= 0
    except (TypeError, ValueError):
        return False


def _ipow(x, g: int):
    """x**g for a static non-negative integer g, pure VALU multiplies."""
    if g == 0:
        return jnp.ones_like(x)
    out = None
    base = x
    while g:
        if g & 1:
            out = base if out is None else out * base
        g >>= 1
        if g:
            base = base * base
    return out


def _pick_tile_rows():
    # 4096 rows = 2 MiB / input / buffer -> 8 MiB double-buffered: fits every
    # chip (v7x has only 64 MiB physical VMEM).  On 128 MiB parts (v5e/v6e)
    # use bigger blocks to amortise the ~0.35us per-grid-step overhead.
    try:
        info = pltpu.get_tpu_info()
        if getattr(info, "vmem_capacity_bytes", 0) >= 128 * 1024 * 1024:
            return 8192
    except Exception:
        pass
    return 4096


def _pick_nsplit():
    try:
        kind = jax.devices()[0].device_kind.lower()
    except Exception:
        return NSPLIT
    # Single-TensorCore inference parts: drop the core-split axis (avoids the
    # one redundant tail-tile DMA when the block count is odd).
    if any(tag in kind for tag in ("v5 lite", "v5e", "v6 lite", "v6e")):
        return 1
    return NSPLIT      # v7x (2 TCs per chip) and unknown parts


# ----------------------------------------------------------------------------
# kernel
# ----------------------------------------------------------------------------
def _tile_partial(p_ref, y_ref, *, alpha, gamma, chunk_rows, valid_elems):
    """(SUBLANES, LANES) partial focal-loss sum over the first `valid_elems`
    (row-major) elements of the current (tile_rows, LANES) tile."""
    tile_rows = p_ref.shape[0]
    chunk_elems = chunk_rows * LANES

    def chunk_loss(r0, nrows, mask_rem=None):
        p = p_ref[pl.ds(r0, nrows), :].astype(jnp.float32)
        y = y_ref[pl.ds(r0, nrows), :].astype(jnp.float32)
        one_m_p = 1.0 - p                      # reused by w1 and log(1-p+eps)
        if _is_nonneg_int(gamma):
            g = int(gamma)
            w1 = _ipow(one_m_p, g)
            w0 = _ipow(p, g)
        else:
            w1 = jnp.power(one_m_p, jnp.float32(gamma))
            w0 = jnp.power(p, jnp.float32(gamma))
        loss = ((-alpha) * w1 * jnp.log(p + EPS) * y
                + (alpha - 1.0) * w0 * jnp.log(one_m_p + EPS) * (1.0 - y))
        if mask_rem is not None:
            # Only the single boundary chunk of the single boundary tile pays
            # for this.  Offsets are chunk-local so int32 never overflows.
            row = lax.broadcasted_iota(jnp.int32, (nrows, LANES), 0)
            lane = lax.broadcasted_iota(jnp.int32, (nrows, LANES), 1)
            loss = jnp.where(row * LANES + lane < mask_rem, loss, 0.0)
        if nrows % SUBLANES == 0:
            # Sublane-aligned relabel + pure VPU adds into one vreg.
            return loss.reshape(-1, SUBLANES, LANES).sum(axis=0)
        # Rare small-odd-row fallback (tiny inputs): reduce rows into row 0.
        colsum = loss.sum(axis=0, keepdims=True)
        rid = lax.broadcasted_iota(jnp.int32, (SUBLANES, LANES), 0)
        return jnp.where(rid == 0, colsum, 0.0)

    acc = jnp.zeros((SUBLANES, LANES), jnp.float32)

    full_chunks = valid_elems // chunk_elems
    if full_chunks == 1:
        acc = acc + chunk_loss(0, chunk_rows)
    elif full_chunks > 1:
        acc = lax.fori_loop(
            0, full_chunks,
            lambda c, a: a + chunk_loss(
                pl.multiple_of(c * chunk_rows, chunk_rows), chunk_rows),
            acc)

    rem = valid_elems - full_chunks * chunk_elems
    if rem:
        r0 = full_chunks * chunk_rows                      # static
        rows_needed = (rem + LANES - 1) // LANES
        nrows = min(((rows_needed + SUBLANES - 1) // SUBLANES) * SUBLANES,
                    tile_rows - r0)
        mask_rem = rem if rem < nrows * LANES else None
        acc = acc + chunk_loss(r0, nrows, mask_rem)
    return acc


def _focal_kernel(p_ref, y_ref, o_ref, *, alpha, gamma, chunk_rows,
                  steps_per_split, total_blocks, last_valid,
                  need_mask, need_overrun):
    s = pl.program_id(0)          # core split (parallel)
    j = pl.program_id(1)          # sequential reduction steps within the split
    t = s * steps_per_split + j   # global tile index

    @pl.when(j == 0)
    def _init():
        o_ref[...] = jnp.zeros(o_ref.shape, jnp.float32)

    tile_elems = p_ref.shape[0] * LANES

    def accumulate(valid):
        o_ref[...] += _tile_partial(p_ref, y_ref, alpha=alpha, gamma=gamma,
                                    chunk_rows=chunk_rows, valid_elems=valid)

    if not need_mask and not need_overrun:
        accumulate(tile_elems)                     # maskless fast path
    elif not need_mask:
        @pl.when(t < total_blocks)                 # skip the one overrun step
        def _(): accumulate(tile_elems)
    else:
        last_block = total_blocks - 1
        @pl.when(t < last_block)                   # full interior tiles
        def _(): accumulate(tile_elems)
        @pl.when(t == last_block)                  # the one boundary tile
        def _(): accumulate(last_valid)
        # t > last_block (grid overrun): nothing.


# ----------------------------------------------------------------------------
# wrapper
# ----------------------------------------------------------------------------
def binary_focal_loss(preds, labels, alpha=0.75, gamma=2):
    assert preds.shape == labels.shape
    total_n = preds.size

    # Flatten in native dtype (reshape is free; no HBM copies from astype).
    p_flat = preds.reshape(-1)
    y_flat = labels.reshape(-1)

    pad = (-total_n) % LANES
    if pad:
        # TODO(synk): a <128-element ragged tail still pays a full-array pad
        # copy; fold it with a wrapper-side reduction if this path gets hot.
        p_flat = jnp.pad(p_flat, (0, pad))
        y_flat = jnp.pad(y_flat, (0, pad))

    rows = (total_n + pad) // LANES
    p2d = p_flat.reshape(rows, LANES)
    y2d = y_flat.reshape(rows, LANES)

    max_tile_rows = _pick_tile_rows()
    tile_rows = rows if rows < max_tile_rows else max_tile_rows
    total_blocks = -(-rows // tile_rows)

    nsplit = min(_pick_nsplit(), total_blocks)
    steps_per_split = -(-total_blocks // nsplit)
    need_overrun = nsplit * steps_per_split > total_blocks
    last_valid = total_n - (total_blocks - 1) * tile_rows * LANES
    need_mask = last_valid < tile_rows * LANES
    last_block = total_blocks - 1

    if need_overrun:
        def in_map(s, j):
            # Clamp the (at most one) overrun step's DMA in-bounds; its
            # compute is skipped inside the kernel with pl.when.
            return (jnp.minimum(s * steps_per_split + j, last_block), 0)
    else:
        def in_map(s, j):
            return (s * steps_per_split + j, 0)

    kernel = functools.partial(
        _focal_kernel, alpha=float(alpha), gamma=gamma, chunk_rows=CHUNK_ROWS,
        steps_per_split=steps_per_split, total_blocks=total_blocks,
        last_valid=last_valid, need_mask=need_mask, need_overrun=need_overrun)

    partials = pl.pallas_call(
        kernel,
        out_shape=jax.ShapeDtypeStruct((nsplit * SUBLANES, LANES), jnp.float32),
        grid_spec=pltpu.PrefetchScalarGridSpec(
            num_scalar_prefetch=0,
            grid=(nsplit, steps_per_split),
            in_specs=[pl.BlockSpec((tile_rows, LANES), in_map),
                      pl.BlockSpec((tile_rows, LANES), in_map)],
            out_specs=pl.BlockSpec((SUBLANES, LANES), lambda s, j: (s, 0)),
        ),
        compiler_params=pltpu.CompilerParams(
            dimension_semantics=("parallel", "arbitrary"),
            vmem_limit_bytes=32 * 1024 * 1024,
        ),
    )(p2d, y2d)

    # One small cross-lane/sublane reduction + mean for the whole tensor.
    return jnp.sum(partials) / jnp.float32(total_n)


def binary_focal_loss_ref(preds, labels, alpha=0.75, gamma=2):
    eps = 1e-07
    loss_y1 = -1 * alpha * jnp.power(1 - preds, gamma) * jnp.log(preds + eps) * labels
    loss_y0 = -1 * (1 - alpha) * jnp.power(preds, gamma) * jnp.log(1 - preds + eps) * (1 - labels)
    return jnp.mean(loss_y0 + loss_y1)


if __name__ == "__main__":
    key = jax.random.PRNGKey(0)

    def make_inputs(k, shape):
        k1, k2 = jax.random.split(k)
        p = jax.nn.sigmoid(jax.random.normal(k1, shape, jnp.float32))
        y = (jax.random.uniform(k2, shape) > 0.5).astype(jnp.float32)
        return p, y

    k_a, k_b, k_c = jax.random.split(key, 3)

    # 1) Small NCHW case (matches the PyTorch convention): single-tile fast path.
    preds, labels = make_inputs(k_a, (2, 4, 16, 16))
    loss = jax.block_until_ready(binary_focal_loss(preds, labels, alpha=0.75, gamma=2))
    ref = binary_focal_loss_ref(preds, labels, alpha=0.75, gamma=2)
    assert jnp.allclose(loss, ref, rtol=1e-4, atol=1e-6), (loss, ref)

    # 2) Large multi-block case: exercises the streaming grid + chunked fori_loop.
    preds, labels = make_inputs(k_b, (4, 8, 256, 256))
    loss = jax.block_until_ready(binary_focal_loss(preds, labels, alpha=0.75, gamma=2))
    ref = binary_focal_loss_ref(preds, labels, alpha=0.75, gamma=2)
    assert jnp.allclose(loss, ref, rtol=1e-4, atol=1e-6), (loss, ref)

    # 3) Non-1024-multiple size: exercises the gated boundary-tile mask path.
    preds, labels = make_inputs(k_c, (2, 2, 10, 100))
    loss = jax.block_until_ready(binary_focal_loss(preds, labels, alpha=0.75, gamma=2))
    ref = binary_focal_loss_ref(preds, labels, alpha=0.75, gamma=2)
    assert jnp.allclose(loss, ref, rtol=1e-4, atol=1e-6), (loss, ref)

    print("KERNEL_OK")
</pallas_src>

<mosaic_0001>
module attributes {stable_mosaic.version = 11 : i64} {
  func.func @_focal_kernel(%arg0: i32, %arg1: i32, %arg2: memref<16x128xf32, #tpu.memory_space<vmem>>, %arg3: memref<16x128xf32, #tpu.memory_space<vmem>>, %arg4: memref<8x128xf32, #tpu.memory_space<vmem>>) attributes {dimension_semantics = [#tpu.dimension_semantics<parallel>, #tpu.dimension_semantics<arbitrary>], iteration_bounds = array<i64: 1, 1>, scalar_prefetch = 0 : i64, scratch_operands = 0 : i64, tpu.core_type = #tpu.core_type<tc>, window_params = [{transform_indices = @transform_0, window_bounds = array<i64: 16, 128>}, {transform_indices = @transform_1, window_bounds = array<i64: 16, 128>}, {transform_indices = @transform_2, window_bounds = array<i64: 8, 128>}]} {
    %c0_i32 = arith.constant 0 : i32
    %0 = arith.cmpi eq, %arg1, %c0_i32 : i32
    %1 = arith.extui %0 : i1 to i32
    %c0_i32_0 = arith.constant 0 : i32
    %2 = arith.cmpi ne, %1, %c0_i32_0 : i32
    scf.if %2 {
      %cst_15 = arith.constant 0.000000e+00 : f32
      %33 = vector.broadcast %cst_15 : f32 to vector<8x128xf32>
      %c0_16 = arith.constant 0 : index
      %c0_17 = arith.constant 0 : index
      %34 = vector.load %arg4[%c0_16, %c0_17] : memref<8x128xf32, #tpu.memory_space<vmem>>, vector<8x128xf32>
      tpu.vector_store %arg4[%c0_16, %c0_17], %33 {strides = array<i32>} : memref<8x128xf32, #tpu.memory_space<vmem>>, vector<8x128xf32>,
    } else {
    }
    %c0 = arith.constant 0 : index
    %c0_1 = arith.constant 0 : index
    %3 = vector.load %arg4[%c0, %c0_1] : memref<8x128xf32, #tpu.memory_space<vmem>>, vector<8x128xf32>
    %cst = arith.constant 0.000000e+00 : f32
    %4 = vector.broadcast %cst : f32 to vector<8x128xf32>
    %c0_2 = arith.constant 0 : index
    %c0_3 = arith.constant 0 : index
    %5 = vector.load %arg2[%c0_2, %c0_3] : memref<16x128xf32, #tpu.memory_space<vmem>>, vector<16x128xf32>
    %c0_4 = arith.constant 0 : index
    %c0_5 = arith.constant 0 : index
    %6 = vector.load %arg3[%c0_4, %c0_5] : memref<16x128xf32, #tpu.memory_space<vmem>>, vector<16x128xf32>
    %cst_6 = arith.constant 1.000000e+00 : f32
    %7 = vector.broadcast %cst_6 : f32 to vector<16x128xf32>
    %8 = arith.subf %7, %5 : vector<16x128xf32>
    %9 = arith.mulf %8, %8 : vector<16x128xf32>
    %10 = arith.mulf %5, %5 : vector<16x128xf32>
    %cst_7 = arith.constant -7.500000e-01 : f32
    %11 = vector.broadcast %cst_7 : f32 to vector<16x128xf32>
    %12 = arith.mulf %11, %9 : vector<16x128xf32>
    %cst_8 = arith.constant 1.000000e-07 : f32
    %13 = vector.broadcast %cst_8 : f32 to vector<16x128xf32>
    %14 = arith.addf %5, %13 : vector<16x128xf32>
    %15 = math.log %14 : vector<16x128xf32>
    %16 = arith.mulf %12, %15 : vector<16x128xf32>
    %17 = arith.mulf %16, %6 : vector<16x128xf32>
    %cst_9 = arith.constant -2.500000e-01 : f32
    %18 = vector.broadcast %cst_9 : f32 to vector<16x128xf32>
    %19 = arith.mulf %18, %10 : vector<16x128xf32>
    %cst_10 = arith.constant 1.000000e-07 : f32
    %20 = vector.broadcast %cst_10 : f32 to vector<16x128xf32>
    %21 = arith.addf %8, %20 : vector<16x128xf32>
    %22 = math.log %21 : vector<16x128xf32>
    %23 = arith.mulf %19, %22 : vector<16x128xf32>
    %cst_11 = arith.constant 1.000000e+00 : f32
    %24 = vector.broadcast %cst_11 : f32 to vector<16x128xf32>
    %25 = arith.subf %24, %6 : vector<16x128xf32>
    %26 = arith.mulf %23, %25 : vector<16x128xf32>
    %27 = arith.addf %17, %26 : vector<16x128xf32>
    %28 = vector.shape_cast %27 : vector<16x128xf32> to vector<2x8x128xf32>
    %cst_12 = arith.constant dense<0.000000e+00> : vector<8x128xf32>
    %29 = vector.multi_reduction <add>, %28, %cst_12 [0] : vector<2x8x128xf32> to vector<8x128xf32>
    %30 = arith.addf %4, %29 : vector<8x128xf32>
    %31 = arith.addf %3, %30 : vector<8x128xf32>
    %c0_13 = arith.constant 0 : index
    %c0_14 = arith.constant 0 : index
    %32 = vector.load %arg4[%c0_13, %c0_14] : memref<8x128xf32, #tpu.memory_space<vmem>>, vector<8x128xf32>
    tpu.vector_store %arg4[%c0_13, %c0_14], %31 {strides = array<i32>} : memref<8x128xf32, #tpu.memory_space<vmem>>, vector<8x128xf32>,
    return
  }
  func.func @transform_0(%arg0: i32, %arg1: i32) -> (i32, i32) {
    %c1_i32 = arith.constant 1 : i32
    %0 = arith.muli %arg0, %c1_i32 : i32
    %1 = arith.addi %0, %arg1 : i32
    %c0_i32 = arith.constant 0 : i32
    %c0_i32_0 = arith.constant 0 : i32
    return %1, %c0_i32 : i32, i32
  }
  func.func @transform_1(%arg0: i32, %arg1: i32) -> (i32, i32) {
    %c1_i32 = arith.constant 1 : i32
    %0 = arith.muli %arg0, %c1_i32 : i32
    %1 = arith.addi %0, %arg1 : i32
    %c0_i32 = arith.constant 0 : i32
    %c0_i32_0 = arith.constant 0 : i32
    return %1, %c0_i32 : i32, i32
  }
  func.func @transform_2(%arg0: i32, %arg1: i32) -> (i32, i32) {
    %c0_i32 = arith.constant 0 : i32
    %c0_i32_0 = arith.constant 0 : i32
    return %arg0, %c0_i32 : i32, i32
  }
}

</mosaic_0001>

<llo_original>
// kernel: tpu_custom_call.1
$region0: #{tpu_custom_call.1}
  #allocation0 [shape = 'u32[]', space=smem, size = 0x4, offset = 0x4, fixed_abs, tag = 'smem constant byte address 0x4 - core index']
  #allocation1 [shape = 'u32[72,128]{1,0:T(1,128)}', space=vmem, size = 0x9000, scoped, tag = 'internal scratch']
  %s0 = inlined_call_operand.hbm [shape: f32[16,128], index: 0, kind: input, shape index: {}]
  %s1 = inlined_call_operand.hbm [shape: f32[16,128], index: 1, kind: input, shape index: {}]
  %s2 = inlined_call_operand.hbm [shape: f32[8,128], index: 2, kind: output, shape index: {}]
  %s3 = sld [smem:[#allocation0]]
  $region30: #{tpu_custom_call.1} parent=0
    _
  %s5 = ssub.s32 1, %s3
  %s6 = scalar_select 0, %s5, %s3
  $region1: #{tpu_custom_call.1} parent=0
    #allocation2 [shape = 'u8[8192]{0}', space=vmem, size = 0x2000, scoped, tag = 'input window, operand 0, single buffered']
    #allocation3 [shape = 's32[1]{0}', space=sflag, size = 0x4, scoped, tag = 'scoped memory for tpu_custom_call.1']
    #allocation4 [shape = 's32[1]{0}', space=sflag, size = 0x4, scoped, tag = 'scoped memory for tpu_custom_call.1']
    #allocation5 [shape = 'u8[8192]{0}', space=vmem, size = 0x2000, scoped, tag = 'input window, operand 1, single buffered']
    #allocation6 [shape = 's32[1]{0}', space=sflag, size = 0x4, scoped, tag = 'scoped memory for tpu_custom_call.1']
    #allocation7 [shape = 'u8[4096]{0}', space=vmem, size = 0x1000, scoped, tag = 'output window, operand 0, single buffered']
    %7 = vsyncpa [#allocation3], 0
    %8 = vsyncpa [#allocation6], 0
    %9 = vsyncpa [#allocation4], 0
    // Predicated region
    $region2: #{tpu_custom_call.1} parent=1 // pred_check
      _
    $region3: #{tpu_custom_call.1} parent=1 // pred_check_branch
      %11 = sbr.rel (0) target = $region5
    $region4: #{tpu_custom_call.1} parent=1 // pred_region
      %s12 = sadd.s32 0, 0
      %s13 = smul.u32 2, %s12
      %15 = vsyncadd [#allocation3], 0
      %s16 = smul.addr %s13, 8
      %s17 = scalar_lea.hbm %s0, %s16
      %s18 = sshll.u32 %s17, 4
      %s19 = int_to_ptr.hbm [resolvable:$true] %s18
      %s20 = sshll.u32 [#allocation2], 4
      %s21 = int_to_ptr.vmem [resolvable:$true] %s20
      %26 = dma.hbm_to_vmem [thread:$0]  %s19, 256, %s21, [#allocation3], 128, 128, 8
    $region5: #{tpu_custom_call.1} parent=1 // pred_fallthru
      _
    // Predicated region
    $region6: #{tpu_custom_call.1} parent=1 // pred_check
      _
    $region7: #{tpu_custom_call.1} parent=1 // pred_check_branch
      %28 = sbr.rel (0) target = $region9
    $region8: #{tpu_custom_call.1} parent=1 // pred_region
      %s29 = sadd.s32 0, 0
      %s30 = smul.u32 2, %s29
      %32 = vsyncadd [#allocation6], 0
      %s33 = smul.addr %s30, 8
      %s34 = scalar_lea.hbm %s1, %s33
      %s35 = sshll.u32 %s34, 4
      %s36 = int_to_ptr.hbm [resolvable:$true] %s35
      %s37 = sshll.u32 [#allocation5], 4
      %s38 = int_to_ptr.vmem [resolvable:$true] %s37
      %43 = dma.hbm_to_vmem [thread:$0]  %s36, 256, %s38, [#allocation6], 128, 128, 8
    $region9: #{tpu_custom_call.1} parent=1 // pred_fallthru
      _
    // Predicated region
    $region10: #{tpu_custom_call.1} parent=1 // pred_check
      _
    $region11: #{tpu_custom_call.1} parent=1 // pred_check_branch
      %45 = sbr.rel (0) target = $region13
    $region12: #{tpu_custom_call.1} parent=1 // pred_region
      %47 = dma.done [#allocation3], 256
    $region13: #{tpu_custom_call.1} parent=1 // pred_fallthru
      _
    // Predicated region
    $region14: #{tpu_custom_call.1} parent=1 // pred_check
      _
    $region15: #{tpu_custom_call.1} parent=1 // pred_check_branch
      %49 = sbr.rel (0) target = $region17
    $region16: #{tpu_custom_call.1} parent=1 // pred_region
      %51 = dma.done [#allocation6], 256
    $region17: #{tpu_custom_call.1} parent=1 // pred_fallthru
      _
    %s52 = sadd.s32 0, 0
    %s53 = smul.u32 2, %s52
    %s54 = sadd.s32 0, 0
    %s55 = smul.u32 2, %s54
    %p56 = scmp.eq.s32.totalorder 0, 0
    // Predicated region
    $region18: #{tpu_custom_call.1} parent=1 // pred_check
      %p57 = pneg %p56
    $region19: #{tpu_custom_call.1} parent=1 // pred_check_branch
      %59 = sbr.rel (%p57) target = $region21
    $region20: #{tpu_custom_call.1} parent=1 // pred_region
      %60 = vst [vmem:[#allocation7] sm:$0xff] 0.0
    $region21: #{tpu_custom_call.1} parent=1 // pred_fallthru
      _
    %v61 = vld [vmem:[#allocation7] sm:$0xff]
    %v62 = vld [vmem:[#allocation2] sm:$0xff]
    %v63 = vld [vmem:[#allocation2 + $0x8] sm:$0xff]
    %v64 = vld [vmem:[#allocation5] sm:$0xff]
    %v65 = vld [vmem:[#allocation5 + $0x8] sm:$0xff]
    %v66 = vsub.f32 1.0, %v62
    %v67 = vsub.f32 1.0, %v63
    %v68 = vmul.f32 %v66, %v66
    %v69 = vmul.f32 %v67, %v67
    %v70 = vmul.f32 %v62, %v62
    %v71 = vmul.f32 %v63, %v63
    %v72 = vmul.f32 %v68, -0.75
    %v73 = vmul.f32 %v69, -0.75
    %v74 = vadd.f32 %v62, 1e-07
    %v75 = vadd.f32 %v63, 1e-07
    %v76 = vlog2.pop %v74
    %v77 = vmul.f32 %v76, 0.6931472
    %v78 = vlog2.pop %v75
    %v79 = vmul.f32 %v78, 0.6931472
    %v80 = vmul.f32 %v72, %v77
    %v81 = vmul.f32 %v73, %v79
    %v82 = vmul.f32 %v80, %v64
    %v83 = vmul.f32 %v81, %v65
    %v84 = vmul.f32 %v70, -0.25
    %v85 = vmul.f32 %v71, -0.25
    %v86 = vadd.f32 %v66, 1e-07
    %v87 = vadd.f32 %v67, 1e-07
    %v88 = vlog2.pop %v86
    %v89 = vmul.f32 %v88, 0.6931472
    %v90 = vlog2.pop %v87
    %v91 = vmul.f32 %v90, 0.6931472
    %v92 = vmul.f32 %v84, %v89
    %v93 = vmul.f32 %v85, %v91
    %v94 = vsub.f32 1.0, %v64
    %v95 = vsub.f32 1.0, %v65
    %v96 = vmul.f32 %v92, %v94
    %v97 = vmul.f32 %v93, %v95
    %v98 = vadd.f32 %v82, %v96
    %v99 = vadd.f32 %v83, %v97
    %v100 = vadd.f32 %v98, %v99
    %v101 = vadd.f32 %v100, 0.0
    %v102 = vadd.f32 %v61, %v101
    %103 = vst [vmem:[#allocation7] sm:$0xff] %v102
    // Predicated region
    $region22: #{tpu_custom_call.1} parent=1 // pred_check
      _
    $region23: #{tpu_custom_call.1} parent=1 // pred_check_branch
      %105 = sbr.rel (0) target = $region25
    $region24: #{tpu_custom_call.1} parent=1 // pred_region
      %107 = vsyncadd [#allocation4], 0
      %s109 = sshll.u32 [#allocation7], 4
      %s110 = int_to_ptr.vmem [resolvable:$true] %s109
      %s111 = sshll.u32 %s2, 4
      %s112 = int_to_ptr.hbm [resolvable:$true] %s111
      %114 = dma.vmem_to_hbm [thread:$0]  %s110, 128, %s112, [#allocation4]
    $region25: #{tpu_custom_call.1} parent=1 // pred_fallthru
      _
    // Predicated region
    $region26: #{tpu_custom_call.1} parent=1 // pred_check
      _
    $region27: #{tpu_custom_call.1} parent=1 // pred_check_branch
      %116 = sbr.rel (0) target = $region29
    $region28: #{tpu_custom_call.1} parent=1 // pred_region
      %118 = dma.done [#allocation4], 128
    $region29: #{tpu_custom_call.1} parent=1 // pred_fallthru
      _
    %119 = vsyncpa [#allocation3], 1
    %120 = vsyncpa [#allocation6], 1
    %121 = vsyncpa [#allocation4], 1

</llo_original>
